<compile_context>
chip_gen: v5e
topology: v5e:2x2
jax: 0.10.0
libtpu: 0.0.40
codegen_flags: <defaults>
</compile_context>

<pallas_src>
import jax
import jax.numpy as jnp
from jax.experimental import pallas as pl
from jax.experimental.pallas import tpu as pltpu


def _downsample1d_kernel(x_ref, w_ref, b_ref, o_ref):
    """One (TM, Cp) row-tile of the strided conv as 3 MXU matmuls.

    x_ref: (3, TM, Cp)  taps k = 0, 1, 2 (already strided/padded in wrapper)
    w_ref: (3, Cp, Cp)  per-tap weight as (C_in, C_out)
    b_ref: (1, Cp)      bias
    o_ref: (TM, Cp)
    """
    acc = jnp.dot(x_ref[0], w_ref[0], preferred_element_type=jnp.float32)
    acc = acc + jnp.dot(x_ref[1], w_ref[1], preferred_element_type=jnp.float32)
    acc = acc + jnp.dot(x_ref[2], w_ref[2], preferred_element_type=jnp.float32)
    # Single full-width, lane-dense store (Cp is a multiple of 128).
    o_ref[...] = (acc + b_ref[...]).astype(o_ref.dtype)


def downsample1d(x, weight, bias, *, block_m: int = 256):
    """Conv1d(dim, dim, 3, stride=2, padding=1), PyTorch layout.

    x:      (B, C, L) float
    weight: (C_out=C, C_in=C, 3)
    bias:   (C,)
    returns (B, C, L_out) float32, L_out = (L - 1) // 2 + 1
    """
    B, C, L = x.shape
    assert weight.shape == (C, C, 3), weight.shape
    assert bias.shape == (C,), bias.shape
    L_out = (L + 2 * 1 - 3) // 2 + 1
    M = B * L_out

    # Channels padded to a 128-lane multiple -> unmasked stores, full-lane MXU.
    Cp = ((C + 127) // 128) * 128
    # Row tile: multiple of 8 sublanes, capped at block_m.  With block_m=256 and
    # f32, per-step VMEM (double-buffered x/out + resident weights) stays well
    # under v7x's 64 MiB budget even for Cp up to ~1024.
    M8 = ((M + 7) // 8) * 8
    TM = M8 if M8 <= block_m else block_m
    M_pad = ((M + TM - 1) // TM) * TM

    # ---------------- layout plumbing in plain XLA (glue, not compute) -------
    xf = x.astype(jnp.float32)
    x_t = jnp.transpose(xf, (0, 2, 1))                        # (B, L, C)
    x_sp = jnp.pad(x_t, ((0, 0), (1, 1), (0, Cp - C)))        # (B, L+2, Cp)

    # Tap k of output position t reads padded spatial index 2*t + k.
    taps = [x_sp[:, k: k + 2 * L_out - 1: 2, :] for k in range(3)]  # (B, L_out, Cp)
    x_taps = jnp.stack(taps, axis=0).reshape(3, M, Cp)
    x_taps = jnp.pad(x_taps, ((0, 0), (0, M_pad - M), (0, 0)))      # (3, M_pad, Cp)

    # (C_out, C_in, 3) -> (3, C_in, C_out), zero-padded channels contribute 0.
    w = jnp.transpose(weight.astype(jnp.float32), (2, 1, 0))        # (3, C, C)
    w = jnp.pad(w, ((0, 0), (0, Cp - C), (0, Cp - C)))              # (3, Cp, Cp)
    b2 = jnp.pad(bias.astype(jnp.float32), (0, Cp - C)).reshape(1, Cp)

    grid = (M_pad // TM,)
    out = pl.pallas_call(
        _downsample1d_kernel,
        out_shape=jax.ShapeDtypeStruct((M_pad, Cp), jnp.float32),
        grid_spec=pltpu.PrefetchScalarGridSpec(
            num_scalar_prefetch=0,
            grid=grid,
            in_specs=[
                pl.BlockSpec((3, TM, Cp), lambda i: (0, i, 0)),   # taps (tiled rows)
                pl.BlockSpec((3, Cp, Cp), lambda i: (0, 0, 0)),   # weights (constant)
                pl.BlockSpec((1, Cp), lambda i: (0, 0)),          # bias (constant)
            ],
            out_specs=pl.BlockSpec((TM, Cp), lambda i: (i, 0)),
        ),
        compiler_params=pltpu.CompilerParams(
            # Row tiles are independent: lets v7x shard them across both TCs.
            dimension_semantics=("parallel",),
        ),
    )(x_taps, w, b2)

    out = out[:M, :C].reshape(B, L_out, C)
    return jnp.transpose(out, (0, 2, 1))                      # (B, C, L_out)


def _reference(x, weight, bias):
    """Pure-JAX reference mirroring the PyTorch forward."""
    out = jax.lax.conv_general_dilated(
        x.astype(jnp.float32),
        weight.astype(jnp.float32),
        window_strides=(2,),
        padding=((1, 1),),
        dimension_numbers=("NCH", "OIH", "NCH"),
    )
    return out + bias.astype(jnp.float32)[None, :, None]


if __name__ == "__main__":
    key = jax.random.PRNGKey(0)
    B, C, L = 2, 4, 16  # Downsample1d(dim=4) on a length-16 sequence
    k1, k2, k3 = jax.random.split(key, 3)

    x = jax.random.normal(k1, (B, C, L), dtype=jnp.float32)
    weight = 0.1 * jax.random.normal(k2, (C, C, 3), dtype=jnp.float32)
    bias = 0.1 * jax.random.normal(k3, (C,), dtype=jnp.float32)

    out = downsample1d(x, weight, bias)
    out = jax.block_until_ready(out)

    ref = _reference(x, weight, bias)
    L_out = (L - 1) // 2 + 1
    assert out.shape == (B, C, L_out), out.shape
    assert out.dtype == jnp.float32, out.dtype
    assert jnp.allclose(out, ref, atol=1e-3, rtol=1e-3), float(
        jnp.max(jnp.abs(out - ref))
    )

    print("KERNEL_OK")
</pallas_src>

<mosaic_0001>
module attributes {stable_mosaic.version = 11 : i64} {
  func.func @_downsample1d_kernel(%arg0: i32, %arg1: memref<3x16x128xf32, #tpu.memory_space<vmem>>, %arg2: memref<3x128x128xf32, #tpu.memory_space<vmem>>, %arg3: memref<1x128xf32, #tpu.memory_space<vmem>>, %arg4: memref<16x128xf32, #tpu.memory_space<vmem>>) attributes {dimension_semantics = [#tpu.dimension_semantics<parallel>], iteration_bounds = array<i64: 1>, scalar_prefetch = 0 : i64, scratch_operands = 0 : i64, tpu.core_type = #tpu.core_type<tc>, window_params = [{transform_indices = @transform_0, window_bounds = array<i64: 3, 16, 128>}, {pipeline_mode = #tpu.pipeline_mode<synchronous>, transform_indices = @transform_1, window_bounds = array<i64: 3, 128, 128>}, {pipeline_mode = #tpu.pipeline_mode<synchronous>, transform_indices = @transform_2, window_bounds = array<i64: 1, 128>}, {transform_indices = @transform_3, window_bounds = array<i64: 16, 128>}]} {
    %c0 = arith.constant 0 : index
    %c0_0 = arith.constant 0 : index
    %c0_1 = arith.constant 0 : index
    %0 = vector.load %arg1[%c0, %c0_0, %c0_1] : memref<3x16x128xf32, #tpu.memory_space<vmem>>, vector<1x16x128xf32>
    %1 = vector.shape_cast %0 : vector<1x16x128xf32> to vector<16x128xf32>
    %c0_2 = arith.constant 0 : index
    %c0_3 = arith.constant 0 : index
    %c0_4 = arith.constant 0 : index
    %2 = vector.load %arg2[%c0_2, %c0_3, %c0_4] : memref<3x128x128xf32, #tpu.memory_space<vmem>>, vector<1x128x128xf32>
    %3 = vector.shape_cast %2 : vector<1x128x128xf32> to vector<128x128xf32>
    %cst = arith.constant dense<0.000000e+00> : vector<16x128xf32>
    %4 = tpu.matmul %1, %3, %cst {dimension_numbers = #tpu.dot_dimension_numbers<[1], [0], [0], [1], [0, 0, 1, 1], [], []>} : vector<16x128xf32>, vector<128x128xf32>, vector<16x128xf32> -> vector<16x128xf32>
    %c1 = arith.constant 1 : index
    %c0_5 = arith.constant 0 : index
    %c0_6 = arith.constant 0 : index
    %5 = vector.load %arg1[%c1, %c0_5, %c0_6] : memref<3x16x128xf32, #tpu.memory_space<vmem>>, vector<1x16x128xf32>
    %6 = vector.shape_cast %5 : vector<1x16x128xf32> to vector<16x128xf32>
    %c1_7 = arith.constant 1 : index
    %c0_8 = arith.constant 0 : index
    %c0_9 = arith.constant 0 : index
    %7 = vector.load %arg2[%c1_7, %c0_8, %c0_9] : memref<3x128x128xf32, #tpu.memory_space<vmem>>, vector<1x128x128xf32>
    %8 = vector.shape_cast %7 : vector<1x128x128xf32> to vector<128x128xf32>
    %cst_10 = arith.constant dense<0.000000e+00> : vector<16x128xf32>
    %9 = tpu.matmul %6, %8, %cst_10 {dimension_numbers = #tpu.dot_dimension_numbers<[1], [0], [0], [1], [0, 0, 1, 1], [], []>} : vector<16x128xf32>, vector<128x128xf32>, vector<16x128xf32> -> vector<16x128xf32>
    %10 = arith.addf %4, %9 : vector<16x128xf32>
    %c2 = arith.constant 2 : index
    %c0_11 = arith.constant 0 : index
    %c0_12 = arith.constant 0 : index
    %11 = vector.load %arg1[%c2, %c0_11, %c0_12] : memref<3x16x128xf32, #tpu.memory_space<vmem>>, vector<1x16x128xf32>
    %12 = vector.shape_cast %11 : vector<1x16x128xf32> to vector<16x128xf32>
    %c2_13 = arith.constant 2 : index
    %c0_14 = arith.constant 0 : index
    %c0_15 = arith.constant 0 : index
    %13 = vector.load %arg2[%c2_13, %c0_14, %c0_15] : memref<3x128x128xf32, #tpu.memory_space<vmem>>, vector<1x128x128xf32>
    %14 = vector.shape_cast %13 : vector<1x128x128xf32> to vector<128x128xf32>
    %cst_16 = arith.constant dense<0.000000e+00> : vector<16x128xf32>
    %15 = tpu.matmul %12, %14, %cst_16 {dimension_numbers = #tpu.dot_dimension_numbers<[1], [0], [0], [1], [0, 0, 1, 1], [], []>} : vector<16x128xf32>, vector<128x128xf32>, vector<16x128xf32> -> vector<16x128xf32>
    %16 = arith.addf %10, %15 : vector<16x128xf32>
    %c0_17 = arith.constant 0 : index
    %c0_18 = arith.constant 0 : index
    %17 = vector.load %arg3[%c0_17, %c0_18] : memref<1x128xf32, #tpu.memory_space<vmem>>, vector<1x128xf32>
    %18 = vector.broadcast %17 : vector<1x128xf32> to vector<16x128xf32>
    %19 = arith.addf %16, %18 : vector<16x128xf32>
    %c0_19 = arith.constant 0 : index
    %c0_20 = arith.constant 0 : index
    %20 = vector.load %arg4[%c0_19, %c0_20] : memref<16x128xf32, #tpu.memory_space<vmem>>, vector<16x128xf32>
    tpu.vector_store %arg4[%c0_19, %c0_20], %19 {strides = array<i32>} : memref<16x128xf32, #tpu.memory_space<vmem>>, vector<16x128xf32>,
    return
  }
  func.func @transform_0(%arg0: i32) -> (i32, i32, i32) {
    %c0_i32 = arith.constant 0 : i32
    %c0_i32_0 = arith.constant 0 : i32
    %c0_i32_1 = arith.constant 0 : i32
    return %c0_i32, %arg0, %c0_i32_0 : i32, i32, i32
  }
  func.func @transform_1(%arg0: i32) -> (i32, i32, i32) {
    %c0_i32 = arith.constant 0 : i32
    %c0_i32_0 = arith.constant 0 : i32
    %c0_i32_1 = arith.constant 0 : i32
    %c0_i32_2 = arith.constant 0 : i32
    return %c0_i32, %c0_i32_0, %c0_i32_1 : i32, i32, i32
  }
  func.func @transform_2(%arg0: i32) -> (i32, i32) {
    %c0_i32 = arith.constant 0 : i32
    %c0_i32_0 = arith.constant 0 : i32
    %c0_i32_1 = arith.constant 0 : i32
    return %c0_i32, %c0_i32_0 : i32, i32
  }
  func.func @transform_3(%arg0: i32) -> (i32, i32) {
    %c0_i32 = arith.constant 0 : i32
    %c0_i32_0 = arith.constant 0 : i32
    return %arg0, %c0_i32 : i32, i32
  }
}

</mosaic_0001>

<llo_original>
// kernel: tpu_custom_call.1
$region0: #{tpu_custom_call.1}
  #allocation0 [shape = 'u32[]', space=smem, size = 0x4, offset = 0x4, fixed_abs, tag = 'smem constant byte address 0x4 - core index']
  #allocation1 [shape = 'u32[72,128]{1,0:T(1,128)}', space=vmem, size = 0x9000, scoped, tag = 'internal scratch']
  %s0 = inlined_call_operand.hbm [shape: f32[3,16,128], index: 0, kind: input, shape index: {}]
  %s1 = inlined_call_operand.hbm [shape: f32[3,128,128], index: 1, kind: input, shape index: {}]
  %s2 = inlined_call_operand.vmem [shape: f32[1,128], index: 2, kind: input, shape index: {}]
  %s3 = inlined_call_operand.hbm [shape: f32[16,128], index: 3, kind: output, shape index: {}]
  %s4 = sld [smem:[#allocation0]]
  $region30: #{tpu_custom_call.1} parent=0
    _
  %s6 = ssub.s32 1, %s4
  %s7 = scalar_select 0, %s6, %s4
  $region1: #{tpu_custom_call.1} parent=0
    #allocation2 [shape = 'u8[24576]{0}', space=vmem, size = 0x6000, scoped, tag = 'input window, operand 0, single buffered']
    #allocation3 [shape = 's32[1]{0}', space=sflag, size = 0x4, scoped, tag = 'scoped memory for tpu_custom_call.1']
    #allocation4 [shape = 's32[1]{0}', space=sflag, size = 0x4, scoped, tag = 'scoped memory for tpu_custom_call.1']
    #allocation5 [shape = 'u8[196608]{0}', space=vmem, size = 0x30000, scoped, tag = 'input window, operand 1, single buffered']
    #allocation6 [shape = 's32[1]{0}', space=sflag, size = 0x4, scoped, tag = 'scoped memory for tpu_custom_call.1']
    #allocation7 [shape = 'u8[8192]{0}', space=vmem, size = 0x2000, scoped, tag = 'output window, operand 0, single buffered']
    %8 = vsyncpa [#allocation3], 0
    %9 = vsyncpa [#allocation6], 0
    %10 = vsyncpa [#allocation4], 0
    // Predicated region
    $region2: #{tpu_custom_call.1} parent=1 // pred_check
      _
    $region3: #{tpu_custom_call.1} parent=1 // pred_check_branch
      %12 = sbr.rel (0) target = $region5
    $region4: #{tpu_custom_call.1} parent=1 // pred_region
      %14 = vsyncadd [#allocation3], 0
      %s15 = sshll.u32 %s0, 4
      %s16 = int_to_ptr.hbm [resolvable:$true] %s15
      %s17 = sshll.u32 [#allocation2], 4
      %s18 = int_to_ptr.vmem [resolvable:$true] %s17
      %23 = dma.hbm_to_vmem [thread:$0]  %s16, 768, %s18, [#allocation3], 128, 128, 8
    $region5: #{tpu_custom_call.1} parent=1 // pred_fallthru
      _
    // Predicated region
    $region6: #{tpu_custom_call.1} parent=1 // pred_check
      _
    $region7: #{tpu_custom_call.1} parent=1 // pred_check_branch
      %25 = sbr.rel (0) target = $region9
    $region8: #{tpu_custom_call.1} parent=1 // pred_region
      %27 = vsyncadd [#allocation6], 0
      %s28 = sshll.u32 %s1, 4
      %s29 = int_to_ptr.hbm [resolvable:$true] %s28
      %s30 = sshll.u32 [#allocation5], 4
      %s31 = int_to_ptr.vmem [resolvable:$true] %s30
      %36 = dma.hbm_to_vmem [thread:$0]  %s29, 6144, %s31, [#allocation6], 128, 128, 8
    $region9: #{tpu_custom_call.1} parent=1 // pred_fallthru
      _
    // Predicated region
    $region10: #{tpu_custom_call.1} parent=1 // pred_check
      _
    $region11: #{tpu_custom_call.1} parent=1 // pred_check_branch
      %38 = sbr.rel (0) target = $region13
    $region12: #{tpu_custom_call.1} parent=1 // pred_region
      _
    $region13: #{tpu_custom_call.1} parent=1 // pred_fallthru
      _
    // Predicated region
    $region14: #{tpu_custom_call.1} parent=1 // pred_check
      _
    $region15: #{tpu_custom_call.1} parent=1 // pred_check_branch
      %40 = sbr.rel (0) target = $region17
    $region16: #{tpu_custom_call.1} parent=1 // pred_region
      %42 = dma.done [#allocation3], 768
    $region17: #{tpu_custom_call.1} parent=1 // pred_fallthru
      _
    // Predicated region
    $region18: #{tpu_custom_call.1} parent=1 // pred_check
      _
    $region19: #{tpu_custom_call.1} parent=1 // pred_check_branch
      %44 = sbr.rel (0) target = $region21
    $region20: #{tpu_custom_call.1} parent=1 // pred_region
      %46 = dma.done [#allocation6], 6144
    $region21: #{tpu_custom_call.1} parent=1 // pred_fallthru
      _
    %v47 = vld [vmem:[#allocation2] sm:$0xff]
    %v48 = vld [vmem:[#allocation2 + $0x8] sm:$0xff]
    %v49 = vld [vmem:[#allocation5] sm:$0xff]
    %v50 = vld [vmem:[#allocation5 + $0x8] sm:$0xff]
    %v51 = vld [vmem:[#allocation5 + $0x10] sm:$0xff]
    %v52 = vld [vmem:[#allocation5 + $0x18] sm:$0xff]
    %v53 = vld [vmem:[#allocation5 + $0x20] sm:$0xff]
    %v54 = vld [vmem:[#allocation5 + $0x28] sm:$0xff]
    %v55 = vld [vmem:[#allocation5 + $0x30] sm:$0xff]
    %v56 = vld [vmem:[#allocation5 + $0x38] sm:$0xff]
    %v57 = vld [vmem:[#allocation5 + $0x40] sm:$0xff]
    %v58 = vld [vmem:[#allocation5 + $0x48] sm:$0xff]
    %v59 = vld [vmem:[#allocation5 + $0x50] sm:$0xff]
    %v60 = vld [vmem:[#allocation5 + $0x58] sm:$0xff]
    %v61 = vld [vmem:[#allocation5 + $0x60] sm:$0xff]
    %v62 = vld [vmem:[#allocation5 + $0x68] sm:$0xff]
    %v63 = vld [vmem:[#allocation5 + $0x70] sm:$0xff]
    %v64 = vld [vmem:[#allocation5 + $0x78] sm:$0xff]
    %s65 = scalar_lea.vmem [#allocation2], 16
    %v66 = vld [vmem:[%s65] sm:$0xff]
    %v67 = vld [vmem:[%s65 + $0x8] sm:$0xff]
    %s68 = scalar_lea.vmem [#allocation5], 128
    %v69 = vld [vmem:[%s68] sm:$0xff]
    %v70 = vld [vmem:[%s68 + $0x8] sm:$0xff]
    %v71 = vld [vmem:[%s68 + $0x10] sm:$0xff]
    %v72 = vld [vmem:[%s68 + $0x18] sm:$0xff]
    %v73 = vld [vmem:[%s68 + $0x20] sm:$0xff]
    %v74 = vld [vmem:[%s68 + $0x28] sm:$0xff]
    %v75 = vld [vmem:[%s68 + $0x30] sm:$0xff]
    %v76 = vld [vmem:[%s68 + $0x38] sm:$0xff]
    %v77 = vld [vmem:[%s68 + $0x40] sm:$0xff]
    %v78 = vld [vmem:[%s68 + $0x48] sm:$0xff]
    %v79 = vld [vmem:[%s68 + $0x50] sm:$0xff]
    %v80 = vld [vmem:[%s68 + $0x58] sm:$0xff]
    %v81 = vld [vmem:[%s68 + $0x60] sm:$0xff]
    %v82 = vld [vmem:[%s68 + $0x68] sm:$0xff]
    %v83 = vld [vmem:[%s68 + $0x70] sm:$0xff]
    %v84 = vld [vmem:[%s68 + $0x78] sm:$0xff]
    %85 = vmatpush.msra.mxu0 %v84
    %86 = vmatpush.msra.mxu0 %v83
    %87 = vmatpush.msra.mxu0 %v82
    %88 = vmatpush.msra.mxu0 %v81
    %89 = vmatpush.msra.mxu0 %v80
    %90 = vmatpush.msra.mxu0 %v79
    %91 = vmatpush.msra.mxu0 %v78
    %92 = vmatpush.msra.mxu0 %v77
    %93 = vmatpush.msra.mxu0 %v76
    %94 = vmatpush.msra.mxu0 %v75
    %95 = vmatpush.msra.mxu0 %v74
    %96 = vmatpush.msra.mxu0 %v73
    %97 = vmatpush.msra.mxu0 %v72
    %98 = vmatpush.msra.mxu0 %v71
    %99 = vmatpush.msra.mxu0 %v70
    %100 = vmatpush.msra.mxu0 %v69
    %101 = vmatmul.f32.gmra.mxu0 %v66
    %v102 = vpop.f32.mrf.mxu0
    %v103 = vadd.f32 0.0, %v102
    %104 = vmatmul.f32.gmra.mxu0 %v67
    %v105 = vpop.f32.mrf.mxu0
    %v106 = vadd.f32 0.0, %v105
    %107 = vdwg.mxu0
    %108 = vmatpush.msra.mxu0 %v64
    %109 = vmatpush.msra.mxu0 %v63
    %110 = vmatpush.msra.mxu0 %v62
    %111 = vmatpush.msra.mxu0 %v61
    %112 = vmatpush.msra.mxu0 %v60
    %113 = vmatpush.msra.mxu0 %v59
    %114 = vmatpush.msra.mxu0 %v58
    %115 = vmatpush.msra.mxu0 %v57
    %116 = vmatpush.msra.mxu0 %v56
    %117 = vmatpush.msra.mxu0 %v55
    %118 = vmatpush.msra.mxu0 %v54
    %119 = vmatpush.msra.mxu0 %v53
    %120 = vmatpush.msra.mxu0 %v52
    %121 = vmatpush.msra.mxu0 %v51
    %122 = vmatpush.msra.mxu0 %v50
    %123 = vmatpush.msra.mxu0 %v49
    %124 = vmatmul.f32.gmra.mxu0 %v47
    %v125 = vpop.f32.mrf.mxu0
    %v126 = vadd.f32 %v103, %v125
    %127 = vmatmul.f32.gmra.mxu0 %v48
    %v128 = vpop.f32.mrf.mxu0
    %v129 = vadd.f32 %v106, %v128
    %130 = vdwg.mxu0
    %s131 = scalar_lea.vmem [#allocation2], 32
    %v132 = vld [vmem:[%s131] sm:$0xff]
    %v133 = vld [vmem:[%s131 + $0x8] sm:$0xff]
    %s134 = scalar_lea.vmem [#allocation5], 256
    %v135 = vld [vmem:[%s134] sm:$0xff]
    %v136 = vld [vmem:[%s134 + $0x8] sm:$0xff]
    %v137 = vld [vmem:[%s134 + $0x10] sm:$0xff]
    %v138 = vld [vmem:[%s134 + $0x18] sm:$0xff]
    %v139 = vld [vmem:[%s134 + $0x20] sm:$0xff]
    %v140 = vld [vmem:[%s134 + $0x28] sm:$0xff]
    %v141 = vld [vmem:[%s134 + $0x30] sm:$0xff]
    %v142 = vld [vmem:[%s134 + $0x38] sm:$0xff]
    %v143 = vld [vmem:[%s134 + $0x40] sm:$0xff]
    %v144 = vld [vmem:[%s134 + $0x48] sm:$0xff]
    %v145 = vld [vmem:[%s134 + $0x50] sm:$0xff]
    %v146 = vld [vmem:[%s134 + $0x58] sm:$0xff]
    %v147 = vld [vmem:[%s134 + $0x60] sm:$0xff]
    %v148 = vld [vmem:[%s134 + $0x68] sm:$0xff]
    %v149 = vld [vmem:[%s134 + $0x70] sm:$0xff]
    %v150 = vld [vmem:[%s134 + $0x78] sm:$0xff]
    %151 = vmatpush.msra.mxu0 %v150
    %152 = vmatpush.msra.mxu0 %v149
    %153 = vmatpush.msra.mxu0 %v148
    %154 = vmatpush.msra.mxu0 %v147
    %155 = vmatpush.msra.mxu0 %v146
    %156 = vmatpush.msra.mxu0 %v145
    %157 = vmatpush.msra.mxu0 %v144
    %158 = vmatpush.msra.mxu0 %v143
    %159 = vmatpush.msra.mxu0 %v142
    %160 = vmatpush.msra.mxu0 %v141
    %161 = vmatpush.msra.mxu0 %v140
    %162 = vmatpush.msra.mxu0 %v139
    %163 = vmatpush.msra.mxu0 %v138
    %164 = vmatpush.msra.mxu0 %v137
    %165 = vmatpush.msra.mxu0 %v136
    %166 = vmatpush.msra.mxu0 %v135
    %167 = vmatmul.f32.gmra.mxu0 %v132
    %v168 = vpop.f32.mrf.mxu0
    %v169 = vadd.f32 0.0, %v168
    %170 = vmatmul.f32.gmra.mxu0 %v133
    %v171 = vpop.f32.mrf.mxu0
    %v172 = vadd.f32 0.0, %v171
    %173 = vdwg.mxu0
    %v174 = vadd.f32 %v126, %v169
    %v175 = vadd.f32 %v129, %v172
    %v176 = vld [vmem:[%s2] sm:$0x1]
    %v178 = vperm.slane %v176, 0
    %v180 = vadd.f32 %v174, %v178
    %v181 = vadd.f32 %v175, %v178
    %182 = vst [vmem:[#allocation7] sm:$0xff] %v180
    %183 = vst [vmem:[#allocation7 + $0x8] sm:$0xff] %v181
    // Predicated region
    $region22: #{tpu_custom_call.1} parent=1 // pred_check
      _
    $region23: #{tpu_custom_call.1} parent=1 // pred_check_branch
      %185 = sbr.rel (0) target = $region25
    $region24: #{tpu_custom_call.1} parent=1 // pred_region
      %187 = vsyncadd [#allocation4], 0
      %s188 = sshll.u32 [#allocation7], 4
      %s189 = int_to_ptr.vmem [resolvable:$true] %s188
      %s190 = sshll.u32 %s3, 4
      %s191 = int_to_ptr.hbm [resolvable:$true] %s190
      %196 = dma.vmem_to_hbm [thread:$0]  %s189, 256, %s191, [#allocation4], 128, 128, 8
    $region25: #{tpu_custom_call.1} parent=1 // pred_fallthru
      _
    // Predicated region
    $region26: #{tpu_custom_call.1} parent=1 // pred_check
      _
    $region27: #{tpu_custom_call.1} parent=1 // pred_check_branch
      %198 = sbr.rel (0) target = $region29
    $region28: #{tpu_custom_call.1} parent=1 // pred_region
      %200 = dma.done [#allocation4], 256
    $region29: #{tpu_custom_call.1} parent=1 // pred_fallthru
      _
    %201 = vsyncpa [#allocation3], 1
    %202 = vsyncpa [#allocation6], 1
    %203 = vsyncpa [#allocation4], 1

</llo_original>
